<compile_context>
chip_gen: v7x
topology: tpu7x:2x2x1
jax: 0.10.0
libtpu: 0.0.40
codegen_flags: <defaults>
</compile_context>

<pallas_src>
import jax
import jax.numpy as jnp
from jax.experimental import pallas as pl
from jax.experimental.pallas import tpu as pltpu

# SELU constants (match torch.nn.SELU)
_SELU_ALPHA = 1.6732632423543772
_SELU_SCALE = 1.0507009873554805


def _selu(x):
    # exp argument clamped to <= 0 so the unselected branch never overflows.
    return _SELU_SCALE * jnp.where(
        x > 0, x, _SELU_ALPHA * (jnp.exp(jnp.minimum(x, 0.0)) - 1.0))


def _round_up(x, m):
    return ((x + m - 1) // m) * m


def _choose_tile(B, batch_tile):
    """Pick a batch tile (multiple of 8).  For large B, use an even, balanced
    number of grid steps so v7x's two TensorCores split the work evenly."""
    batch_tile = max(8, _round_up(batch_tile, 8))
    if B <= 512:
        return min(batch_tile, _round_up(B, 8))
    steps = max(2, pl.cdiv(B, batch_tile))
    if steps % 2:
        steps += 1
    return _round_up(pl.cdiv(B, steps), 8)


# ----------------------------- kernels ---------------------------------
def _mlp_from_refs(x_bf16, time_term,
                   w1x_ref, b1_ref, w2_ref, b2_ref, w3_ref, b3_ref):
    """Fused 3-layer time-varying MLP on one batch tile (f32 accumulation)."""
    h1 = jnp.dot(x_bf16, w1x_ref[...], preferred_element_type=jnp.float32)
    h1 = _selu(h1 + time_term + b1_ref[...])                      # f32
    h2 = jnp.dot(h1.astype(jnp.bfloat16), w2_ref[...],
                 preferred_element_type=jnp.float32)
    h2 = _selu(h2 + b2_ref[...])                                  # f32
    return jnp.dot(h2.astype(jnp.bfloat16), w3_ref[...],
                   preferred_element_type=jnp.float32) + b3_ref[...]


def _ode_mlp_kernel_scalar_t(x_ref, t_ref, w1x_ref, w1t_ref, b1_ref,
                             w2_ref, b2_ref, w3_ref, b3_ref, out_ref):
    """Scalar-time variant: t_ref is a (1,1) f32 scalar living in SMEM."""
    x = x_ref[...].astype(jnp.bfloat16)           # cast on VPU, hidden by MXU
    time_term = t_ref[0, 0] * w1t_ref[...]        # (1, H) rank-1 time fold-in
    out = _mlp_from_refs(x, time_term, w1x_ref, b1_ref,
                         w2_ref, b2_ref, w3_ref, b3_ref)
    out_ref[...] = out.astype(out_ref.dtype)


def _ode_mlp_kernel_rowwise_t(x_ref, t_ref, w1x_ref, w1t_ref, b1_ref,
                              w2_ref, b2_ref, w3_ref, b3_ref, out_ref):
    """Per-row-time variant: t_ref is a (TB,1) f32 VMEM column."""
    x = x_ref[...].astype(jnp.bfloat16)
    time_term = t_ref[...] * w1t_ref[...]         # (TB,1)*(1,H) -> (TB,H)
    out = _mlp_from_refs(x, time_term, w1x_ref, b1_ref,
                         w2_ref, b2_ref, w3_ref, b3_ref)
    out_ref[...] = out.astype(out_ref.dtype)


# ----------------------------- wrapper ----------------------------------
def prepare_params(raw_params):
    """One-time weight preprocessing.  raw_params = (w1, b1, w2, b2, w3, b3)
    with w1 of shape (D+1, H) (last row = time row).  Call once and reuse
    across ODE-solver steps so each forward launches exactly one pallas_call."""
    w1, b1, w2, b2, w3, b3 = raw_params
    Din, H = w1.shape
    D = Din - 1
    w1x = jnp.asarray(w1[:D], jnp.bfloat16)              # (D, H)
    w1t = jnp.asarray(w1[D:D + 1], jnp.float32)          # (1, H) time row
    b1f = jnp.asarray(jnp.reshape(b1, (1, H)), jnp.float32)
    w2b = jnp.asarray(w2, jnp.bfloat16)                  # (H, H)
    b2f = jnp.asarray(jnp.reshape(b2, (1, H)), jnp.float32)
    w3b = jnp.asarray(w3, jnp.bfloat16)                  # (H, D)
    b3f = jnp.asarray(jnp.reshape(b3, (1, -1)), jnp.float32)
    return (w1x, w1t, b1f, w2b, b2f, w3b, b3f)


def ode_wrapper_forward(t, x, params, *, batch_tile=2048):
    """ODEwrapper.forward(t, x) with a time-varying MLP func.

    t      : scalar, (B,) or (B, 1) times
    x      : (B, D) state (any float dtype; cast to bf16 inside the kernel)
    params : raw 6-tuple (w1, b1, w2, b2, w3, b3) with w1 (D+1, H),
             or a prepared 7-tuple from prepare_params() (preferred for loops).
    returns dx/dt of shape (B, D), float32.
    """
    if len(params) == 6:
        params = prepare_params(params)
    w1x, w1t, b1f, w2b, b2f, w3b, b3f = params

    B, D = x.shape
    H = w1x.shape[1]
    assert w1x.shape[0] == D, "time_varying func expects input dim D+1"

    tile = _choose_tile(B, batch_tile)
    grid = (pl.cdiv(B, tile),)          # partial edge block masked by Pallas

    # Weights/biases: constant block index -> resident across grid steps.
    # (pipeline_mode=pl.Buffered(1) would shave ~30-50 KB VMEM; skipped as a
    #  low-value micro-opt.)
    weight_specs = [
        pl.BlockSpec((D, H), lambda i: (0, 0)),      # W1[:D]      bf16
        pl.BlockSpec((1, H), lambda i: (0, 0)),      # W1 time row f32
        pl.BlockSpec((1, H), lambda i: (0, 0)),      # b1          f32
        pl.BlockSpec((H, H), lambda i: (0, 0)),      # W2          bf16
        pl.BlockSpec((1, H), lambda i: (0, 0)),      # b2          f32
        pl.BlockSpec((H, D), lambda i: (0, 0)),      # W3          bf16
        pl.BlockSpec((1, D), lambda i: (0, 0)),      # b3          f32
    ]
    x_spec = pl.BlockSpec((tile, D), lambda i: (i, 0))
    out_spec = pl.BlockSpec((tile, D), lambda i: (i, 0))

    t = jnp.asarray(t)
    if t.ndim == 0:
        # Standard ODE-solver call: scalar t -> (1,1) SMEM scalar, folded in
        # as a rank-1 update t * W1[D, :].  No (B,1) HBM/VMEM time buffer.
        t_arr = t.reshape(1, 1).astype(jnp.float32)
        t_spec = pl.BlockSpec(memory_space=pltpu.MemorySpace.SMEM)
        kernel = _ode_mlp_kernel_scalar_t
    else:
        # Per-row times: keep a (B,1) f32 column in VMEM.
        t_arr = t.reshape(B, 1).astype(jnp.float32)
        t_spec = pl.BlockSpec((tile, 1), lambda i: (i, 0))
        kernel = _ode_mlp_kernel_rowwise_t

    out = pl.pallas_call(
        kernel,
        out_shape=jax.ShapeDtypeStruct((B, D), jnp.float32),
        grid_spec=pltpu.PrefetchScalarGridSpec(
            num_scalar_prefetch=0,
            grid=grid,
            in_specs=[x_spec, t_spec] + weight_specs,
            out_specs=out_spec,
        ),
        compiler_params=pltpu.CompilerParams(
            dimension_semantics=("parallel",),
            vmem_limit_bytes=32 * 1024 * 1024),
    )(x, t_arr, w1x, w1t, b1f, w2b, b2f, w3b, b3f)
    return out

# TODO(synk): compute_G (Jacobian-trace path of the wrapped func) is not part
# of the forward pass and is left to autodiff / a separate kernel.


# ----------------------------- references ------------------------------
def _reference_forward_f32(t, x, raw_params):
    """Pure-JAX f32 reference matching the torch module exactly."""
    w1, b1, w2, b2, w3, b3 = raw_params
    B = x.shape[0]
    t = jnp.asarray(t)
    tcol = (jnp.broadcast_to(t, (B, 1)) if t.ndim == 0
            else t.reshape(B, 1)).astype(jnp.float32)
    xin = jnp.concatenate([x, tcol], axis=-1).astype(jnp.float32)
    h1 = _selu(xin @ w1 + b1)
    h2 = _selu(h1 @ w2 + b2)
    return h2 @ w3 + b3


def _reference_forward_bf16(t, x, raw_params):
    """Mirror of the kernel's bf16-matmul / f32-accumulate math."""
    w1, b1, w2, b2, w3, b3 = raw_params
    B, D = x.shape
    t = jnp.asarray(t)
    tcol = (jnp.broadcast_to(t, (B, 1)) if t.ndim == 0
            else t.reshape(B, 1)).astype(jnp.float32)
    w1x = w1[:D].astype(jnp.bfloat16)
    w1t = w1[D:D + 1].astype(jnp.float32)
    h1 = _selu(jnp.dot(x.astype(jnp.bfloat16), w1x,
                       preferred_element_type=jnp.float32)
               + tcol * w1t + b1.reshape(1, -1))
    h2 = _selu(jnp.dot(h1.astype(jnp.bfloat16), w2.astype(jnp.bfloat16),
                       preferred_element_type=jnp.float32) + b2.reshape(1, -1))
    return (jnp.dot(h2.astype(jnp.bfloat16), w3.astype(jnp.bfloat16),
                    preferred_element_type=jnp.float32) + b3.reshape(1, -1))


def init_params(key, dim, hidden):
    """Deterministic synthetic weights for the time-varying MLP func."""
    k1, k2, k3 = jax.random.split(key, 3)
    din = dim + 1  # time_varying=True -> one extra time column
    w1 = jax.random.normal(k1, (din, hidden), jnp.float32) / jnp.sqrt(din)
    b1 = jnp.zeros((1, hidden), jnp.float32)
    w2 = jax.random.normal(k2, (hidden, hidden), jnp.float32) / jnp.sqrt(hidden)
    b2 = jnp.zeros((1, hidden), jnp.float32)
    w3 = jax.random.normal(k3, (hidden, dim), jnp.float32) / jnp.sqrt(hidden)
    b3 = jnp.zeros((1, dim), jnp.float32)
    return (w1, b1, w2, b2, w3, b3)


if __name__ == "__main__":
    key = jax.random.PRNGKey(0)
    kx, kp, kx2, kt2, kx3 = jax.random.split(key, 5)

    B, D, H = 16, 32, 64
    raw_params = init_params(kp, D, H)
    prepared = prepare_params(raw_params)   # hoisted weight prep (done once)

    # Case 1: scalar time (standard ODE-solver call), prepared params,
    # SMEM scalar-t path.
    x = jax.random.normal(kx, (B, D), jnp.float32)
    t = jnp.asarray(0.5, jnp.float32)
    dxdt = jax.block_until_ready(ode_wrapper_forward(t, x, prepared))
    assert dxdt.shape == (B, D)
    ref_bf16 = _reference_forward_bf16(t, x, raw_params)
    ref_f32 = _reference_forward_f32(t, x, raw_params)
    assert jnp.allclose(dxdt, ref_bf16, atol=2e-2, rtol=2e-2), "mismatch (bf16 ref)"
    assert jnp.allclose(dxdt, ref_f32, atol=8e-2, rtol=8e-2), "mismatch (f32 ref)"

    # Case 2: ragged batch + per-row time column (exercises the unpadded
    # partial-edge-block path and the raw-params path).
    B2 = 13
    x2 = jax.random.normal(kx2, (B2, D), jnp.float32)
    t2 = jax.random.uniform(kt2, (B2, 1), jnp.float32)
    dxdt2 = jax.block_until_ready(ode_wrapper_forward(t2, x2, raw_params))
    assert dxdt2.shape == (B2, D)
    ref2 = _reference_forward_bf16(t2, x2, raw_params)
    assert jnp.allclose(dxdt2, ref2, atol=2e-2, rtol=2e-2), "mismatch (ragged)"

    # Case 3: larger batch, scalar t -> 2 balanced grid steps (megacore split)
    # with a masked partial edge block.
    B3 = 1030
    x3 = jax.random.normal(kx3, (B3, D), jnp.float32)
    dxdt3 = jax.block_until_ready(ode_wrapper_forward(t, x3, prepared))
    assert dxdt3.shape == (B3, D)
    ref3 = _reference_forward_bf16(t, x3, raw_params)
    assert jnp.allclose(dxdt3, ref3, atol=2e-2, rtol=2e-2), "mismatch (2-step grid)"

    print("KERNEL_OK")
</pallas_src>

<mosaic_0001>
module attributes {stable_mosaic.version = 11 : i64} {
  func.func @_ode_mlp_kernel_scalar_t(%arg0: i32, %arg1: memref<16x32xf32, #tpu.memory_space<vmem>>, %arg2: memref<1x1xf32, #tpu.memory_space<smem>>, %arg3: memref<32x64xbf16, #tpu.memory_space<vmem>>, %arg4: memref<1x64xf32, #tpu.memory_space<vmem>>, %arg5: memref<1x64xf32, #tpu.memory_space<vmem>>, %arg6: memref<64x64xbf16, #tpu.memory_space<vmem>>, %arg7: memref<1x64xf32, #tpu.memory_space<vmem>>, %arg8: memref<64x32xbf16, #tpu.memory_space<vmem>>, %arg9: memref<1x32xf32, #tpu.memory_space<vmem>>, %arg10: memref<16x32xf32, #tpu.memory_space<vmem>>) attributes {dimension_semantics = [#tpu.dimension_semantics<parallel>], iteration_bounds = array<i64: 1>, scalar_prefetch = 0 : i64, scratch_operands = 0 : i64, tpu.core_type = #tpu.core_type<tc>, window_params = [{transform_indices = @transform_0, window_bounds = array<i64: 16, 32>}, {transform_indices = @transform_1, window_bounds = array<i64: 1, 1>}, {pipeline_mode = #tpu.pipeline_mode<synchronous>, transform_indices = @transform_2, window_bounds = array<i64: 32, 64>}, {pipeline_mode = #tpu.pipeline_mode<synchronous>, transform_indices = @transform_3, window_bounds = array<i64: 1, 64>}, {pipeline_mode = #tpu.pipeline_mode<synchronous>, transform_indices = @transform_4, window_bounds = array<i64: 1, 64>}, {pipeline_mode = #tpu.pipeline_mode<synchronous>, transform_indices = @transform_5, window_bounds = array<i64: 64, 64>}, {pipeline_mode = #tpu.pipeline_mode<synchronous>, transform_indices = @transform_6, window_bounds = array<i64: 1, 64>}, {pipeline_mode = #tpu.pipeline_mode<synchronous>, transform_indices = @transform_7, window_bounds = array<i64: 64, 32>}, {pipeline_mode = #tpu.pipeline_mode<synchronous>, transform_indices = @transform_8, window_bounds = array<i64: 1, 32>}, {transform_indices = @transform_9, window_bounds = array<i64: 16, 32>}]} {
    %c0 = arith.constant 0 : index
    %c0_0 = arith.constant 0 : index
    %0 = vector.load %arg1[%c0, %c0_0] : memref<16x32xf32, #tpu.memory_space<vmem>>, vector<16x32xf32>
    %1 = arith.truncf %0 : vector<16x32xf32> to vector<16x32xbf16>
    %c0_1 = arith.constant 0 : index
    %c0_2 = arith.constant 0 : index
    %2 = memref.load %arg2[%c0_1, %c0_2] : memref<1x1xf32, #tpu.memory_space<smem>>
    %c0_3 = arith.constant 0 : index
    %c0_4 = arith.constant 0 : index
    %3 = vector.load %arg4[%c0_3, %c0_4] : memref<1x64xf32, #tpu.memory_space<vmem>>, vector<1x64xf32>
    %4 = vector.broadcast %2 : f32 to vector<1x64xf32>
    %5 = arith.mulf %4, %3 : vector<1x64xf32>
    %c0_5 = arith.constant 0 : index
    %c0_6 = arith.constant 0 : index
    %6 = vector.load %arg3[%c0_5, %c0_6] : memref<32x64xbf16, #tpu.memory_space<vmem>>, vector<32x64xbf16>
    %cst = arith.constant dense<0.000000e+00> : vector<16x64xf32>
    %7 = tpu.matmul %1, %6, %cst {dimension_numbers = #tpu.dot_dimension_numbers<[1], [0], [0], [1], [0, 0, 1, 1], [], []>} : vector<16x32xbf16>, vector<32x64xbf16>, vector<16x64xf32> -> vector<16x64xf32>
    %8 = vector.broadcast %5 : vector<1x64xf32> to vector<16x64xf32>
    %9 = arith.addf %7, %8 : vector<16x64xf32>
    %c0_7 = arith.constant 0 : index
    %c0_8 = arith.constant 0 : index
    %10 = vector.load %arg5[%c0_7, %c0_8] : memref<1x64xf32, #tpu.memory_space<vmem>>, vector<1x64xf32>
    %11 = vector.broadcast %10 : vector<1x64xf32> to vector<16x64xf32>
    %12 = arith.addf %9, %11 : vector<16x64xf32>
    %cst_9 = arith.constant 0.000000e+00 : f32
    %13 = vector.broadcast %cst_9 : f32 to vector<16x64xf32>
    %14 = arith.cmpf ogt, %12, %13 : vector<16x64xf32>
    %cst_10 = arith.constant 0.000000e+00 : f32
    %15 = vector.broadcast %cst_10 : f32 to vector<16x64xf32>
    %16 = arith.minimumf %12, %15 : vector<16x64xf32>
    %17 = math.exp %16 : vector<16x64xf32>
    %cst_11 = arith.constant 1.000000e+00 : f32
    %18 = vector.broadcast %cst_11 : f32 to vector<16x64xf32>
    %19 = arith.subf %17, %18 : vector<16x64xf32>
    %cst_12 = arith.constant 1.67326319 : f32
    %20 = vector.broadcast %cst_12 : f32 to vector<16x64xf32>
    %21 = arith.mulf %20, %19 : vector<16x64xf32>
    %22 = arith.select %14, %12, %21 : vector<16x64xi1>, vector<16x64xf32>
    %cst_13 = arith.constant 1.05070102 : f32
    %23 = vector.broadcast %cst_13 : f32 to vector<16x64xf32>
    %24 = arith.mulf %23, %22 : vector<16x64xf32>
    %25 = arith.truncf %24 : vector<16x64xf32> to vector<16x64xbf16>
    %c0_14 = arith.constant 0 : index
    %c0_15 = arith.constant 0 : index
    %26 = vector.load %arg6[%c0_14, %c0_15] : memref<64x64xbf16, #tpu.memory_space<vmem>>, vector<64x64xbf16>
    %cst_16 = arith.constant dense<0.000000e+00> : vector<16x64xf32>
    %27 = tpu.matmul %25, %26, %cst_16 {dimension_numbers = #tpu.dot_dimension_numbers<[1], [0], [0], [1], [0, 0, 1, 1], [], []>} : vector<16x64xbf16>, vector<64x64xbf16>, vector<16x64xf32> -> vector<16x64xf32>
    %c0_17 = arith.constant 0 : index
    %c0_18 = arith.constant 0 : index
    %28 = vector.load %arg7[%c0_17, %c0_18] : memref<1x64xf32, #tpu.memory_space<vmem>>, vector<1x64xf32>
    %29 = vector.broadcast %28 : vector<1x64xf32> to vector<16x64xf32>
    %30 = arith.addf %27, %29 : vector<16x64xf32>
    %cst_19 = arith.constant 0.000000e+00 : f32
    %31 = vector.broadcast %cst_19 : f32 to vector<16x64xf32>
    %32 = arith.cmpf ogt, %30, %31 : vector<16x64xf32>
    %cst_20 = arith.constant 0.000000e+00 : f32
    %33 = vector.broadcast %cst_20 : f32 to vector<16x64xf32>
    %34 = arith.minimumf %30, %33 : vector<16x64xf32>
    %35 = math.exp %34 : vector<16x64xf32>
    %cst_21 = arith.constant 1.000000e+00 : f32
    %36 = vector.broadcast %cst_21 : f32 to vector<16x64xf32>
    %37 = arith.subf %35, %36 : vector<16x64xf32>
    %cst_22 = arith.constant 1.67326319 : f32
    %38 = vector.broadcast %cst_22 : f32 to vector<16x64xf32>
    %39 = arith.mulf %38, %37 : vector<16x64xf32>
    %40 = arith.select %32, %30, %39 : vector<16x64xi1>, vector<16x64xf32>
    %cst_23 = arith.constant 1.05070102 : f32
    %41 = vector.broadcast %cst_23 : f32 to vector<16x64xf32>
    %42 = arith.mulf %41, %40 : vector<16x64xf32>
    %43 = arith.truncf %42 : vector<16x64xf32> to vector<16x64xbf16>
    %c0_24 = arith.constant 0 : index
    %c0_25 = arith.constant 0 : index
    %44 = vector.load %arg8[%c0_24, %c0_25] : memref<64x32xbf16, #tpu.memory_space<vmem>>, vector<64x32xbf16>
    %cst_26 = arith.constant dense<0.000000e+00> : vector<16x32xf32>
    %45 = tpu.matmul %43, %44, %cst_26 {dimension_numbers = #tpu.dot_dimension_numbers<[1], [0], [0], [1], [0, 0, 1, 1], [], []>} : vector<16x64xbf16>, vector<64x32xbf16>, vector<16x32xf32> -> vector<16x32xf32>
    %c0_27 = arith.constant 0 : index
    %c0_28 = arith.constant 0 : index
    %46 = vector.load %arg9[%c0_27, %c0_28] : memref<1x32xf32, #tpu.memory_space<vmem>>, vector<1x32xf32>
    %47 = vector.broadcast %46 : vector<1x32xf32> to vector<16x32xf32>
    %48 = arith.addf %45, %47 : vector<16x32xf32>
    %c0_29 = arith.constant 0 : index
    %c0_30 = arith.constant 0 : index
    %49 = vector.load %arg10[%c0_29, %c0_30] : memref<16x32xf32, #tpu.memory_space<vmem>>, vector<16x32xf32>
    tpu.vector_store %arg10[%c0_29, %c0_30], %48 {strides = array<i32>} : memref<16x32xf32, #tpu.memory_space<vmem>>, vector<16x32xf32>,
    return
  }
  func.func @transform_0(%arg0: i32) -> (i32, i32) {
    %c0_i32 = arith.constant 0 : i32
    %c0_i32_0 = arith.constant 0 : i32
    return %arg0, %c0_i32 : i32, i32
  }
  func.func @transform_1(%arg0: i32) -> (i32, i32) {
    %c0_i32 = arith.constant 0 : i32
    %c0_i32_0 = arith.constant 0 : i32
    %c0_i32_1 = arith.constant 0 : i32
    return %c0_i32, %c0_i32_0 : i32, i32
  }
  func.func @transform_2(%arg0: i32) -> (i32, i32) {
    %c0_i32 = arith.constant 0 : i32
    %c0_i32_0 = arith.constant 0 : i32
    %c0_i32_1 = arith.constant 0 : i32
    return %c0_i32, %c0_i32_0 : i32, i32
  }
  func.func @transform_3(%arg0: i32) -> (i32, i32) {
    %c0_i32 = arith.constant 0 : i32
    %c0_i32_0 = arith.constant 0 : i32
    %c0_i32_1 = arith.constant 0 : i32
    return %c0_i32, %c0_i32_0 : i32, i32
  }
  func.func @transform_4(%arg0: i32) -> (i32, i32) {
    %c0_i32 = arith.constant 0 : i32
    %c0_i32_0 = arith.constant 0 : i32
    %c0_i32_1 = arith.constant 0 : i32
    return %c0_i32, %c0_i32_0 : i32, i32
  }
  func.func @transform_5(%arg0: i32) -> (i32, i32) {
    %c0_i32 = arith.constant 0 : i32
    %c0_i32_0 = arith.constant 0 : i32
    %c0_i32_1 = arith.constant 0 : i32
    return %c0_i32, %c0_i32_0 : i32, i32
  }
  func.func @transform_6(%arg0: i32) -> (i32, i32) {
    %c0_i32 = arith.constant 0 : i32
    %c0_i32_0 = arith.constant 0 : i32
    %c0_i32_1 = arith.constant 0 : i32
    return %c0_i32, %c0_i32_0 : i32, i32
  }
  func.func @transform_7(%arg0: i32) -> (i32, i32) {
    %c0_i32 = arith.constant 0 : i32
    %c0_i32_0 = arith.constant 0 : i32
    %c0_i32_1 = arith.constant 0 : i32
    return %c0_i32, %c0_i32_0 : i32, i32
  }
  func.func @transform_8(%arg0: i32) -> (i32, i32) {
    %c0_i32 = arith.constant 0 : i32
    %c0_i32_0 = arith.constant 0 : i32
    %c0_i32_1 = arith.constant 0 : i32
    return %c0_i32, %c0_i32_0 : i32, i32
  }
  func.func @transform_9(%arg0: i32) -> (i32, i32) {
    %c0_i32 = arith.constant 0 : i32
    %c0_i32_0 = arith.constant 0 : i32
    return %arg0, %c0_i32 : i32, i32
  }
}

</mosaic_0001>

<llo_original>
// kernel: tpu_custom_call.1
$region0: #{tpu_custom_call.1}
  #allocation0 [shape = 'u32[]', space=smem, size = 0x4, offset = 0x4, fixed_abs, tag = 'smem constant byte address 0x4 - core index']
  #allocation1 [shape = 'u32[144,128]{1,0:T(1,128)}', space=vmem, size = 0x12000, scoped, tag = 'internal scratch']
  #allocation2 [shape = 'f32[1,1]{1,0:T(1,128)S(6)}', space=smem, size = 0x200, scoped, tag = 'scoped memory for tpu_custom_call.1']
  %s0 = inlined_call_operand.vmem [shape: f32[16,32], index: 0, kind: input, shape index: {}]
  %s1 = inlined_call_operand.<no memory space> [shape: f32[1,1], index: 1, kind: input, shape index: {}]
  %s2 = inlined_call_operand.hbm [shape: bf16[32,64], index: 2, kind: input, shape index: {}]
  %s3 = inlined_call_operand.vmem [shape: f32[1,64], index: 3, kind: input, shape index: {}]
  %s4 = inlined_call_operand.vmem [shape: f32[1,64], index: 4, kind: input, shape index: {}]
  %s5 = inlined_call_operand.vmem [shape: bf16[64,64], index: 5, kind: input, shape index: {}]
  %s6 = inlined_call_operand.vmem [shape: f32[1,64], index: 6, kind: input, shape index: {}]
  %s7 = inlined_call_operand.vmem [shape: bf16[64,32], index: 7, kind: input, shape index: {}]
  %s8 = inlined_call_operand.vmem [shape: f32[1,32], index: 8, kind: input, shape index: {}]
  %s9 = inlined_call_operand.hbm [shape: f32[16,32], index: 9, kind: output, shape index: {}]
  %s10 = sld [smem:[#allocation0]]
  $region50: #{tpu_custom_call.1} parent=0
    _
  %s12 = ssub.s32 1, %s10
  %s13 = scalar_select 0, %s12, %s10
  %14 = sst [smem:[#allocation2]] %s1
  $region1: #{tpu_custom_call.1} parent=0
    #allocation3 [shape = 'u8[8192]{0}', space=vmem, size = 0x2000, scoped, tag = 'input window, operand 2, single buffered']
    #allocation4 [shape = 's32[1]{0}', space=sflag, size = 0x4, scoped, tag = 'scoped memory for tpu_custom_call.1']
    #allocation5 [shape = 's32[1]{0}', space=sflag, size = 0x4, scoped, tag = 'scoped memory for tpu_custom_call.1']
    #allocation6 [shape = 'u8[8192]{0}', space=vmem, size = 0x2000, scoped, tag = 'output window, operand 0, single buffered']
    %15 = vsyncpa [#allocation4], 0
    %16 = vsyncpa [#allocation5], 0
    // Predicated region
    $region2: #{tpu_custom_call.1} parent=1 // pred_check
      _
    $region3: #{tpu_custom_call.1} parent=1 // pred_check_branch
      %18 = sbr.rel (0) target = $region5
    $region4: #{tpu_custom_call.1} parent=1 // pred_region
      _
    $region5: #{tpu_custom_call.1} parent=1 // pred_fallthru
      _
    // Predicated region
    $region6: #{tpu_custom_call.1} parent=1 // pred_check
      _
    $region7: #{tpu_custom_call.1} parent=1 // pred_check_branch
      %20 = sbr.rel (0) target = $region9
    $region8: #{tpu_custom_call.1} parent=1 // pred_region
      _
    $region9: #{tpu_custom_call.1} parent=1 // pred_fallthru
      _
    // Predicated region
    $region10: #{tpu_custom_call.1} parent=1 // pred_check
      _
    $region11: #{tpu_custom_call.1} parent=1 // pred_check_branch
      %22 = sbr.rel (0) target = $region13
    $region12: #{tpu_custom_call.1} parent=1 // pred_region
      %s24 = ssub.s32 256, 256
      %25 = vsyncadd [#allocation4], %s24
      %s26 = sshll.u32 [#allocation3], 4
      %s27 = int_to_ptr.vmem [resolvable:$true] %s26
      %32 = dma.hbm_to_vmem [thread:$0]  %s2, 256, %s27, [#allocation4], 64, 64, 4
    $region13: #{tpu_custom_call.1} parent=1 // pred_fallthru
      _
    // Predicated region
    $region14: #{tpu_custom_call.1} parent=1 // pred_check
      _
    $region15: #{tpu_custom_call.1} parent=1 // pred_check_branch
      %34 = sbr.rel (0) target = $region17
    $region16: #{tpu_custom_call.1} parent=1 // pred_region
      _
    $region17: #{tpu_custom_call.1} parent=1 // pred_fallthru
      _
    // Predicated region
    $region18: #{tpu_custom_call.1} parent=1 // pred_check
      _
    $region19: #{tpu_custom_call.1} parent=1 // pred_check_branch
      %36 = sbr.rel (0) target = $region21
    $region20: #{tpu_custom_call.1} parent=1 // pred_region
      _
    $region21: #{tpu_custom_call.1} parent=1 // pred_fallthru
      _
    // Predicated region
    $region22: #{tpu_custom_call.1} parent=1 // pred_check
      _
    $region23: #{tpu_custom_call.1} parent=1 // pred_check_branch
      %38 = sbr.rel (0) target = $region25
    $region24: #{tpu_custom_call.1} parent=1 // pred_region
      _
    $region25: #{tpu_custom_call.1} parent=1 // pred_fallthru
      _
    // Predicated region
    $region26: #{tpu_custom_call.1} parent=1 // pred_check
      _
    $region27: #{tpu_custom_call.1} parent=1 // pred_check_branch
      %40 = sbr.rel (0) target = $region29
    $region28: #{tpu_custom_call.1} parent=1 // pred_region
      _
    $region29: #{tpu_custom_call.1} parent=1 // pred_fallthru
      _
    // Predicated region
    $region30: #{tpu_custom_call.1} parent=1 // pred_check
      _
    $region31: #{tpu_custom_call.1} parent=1 // pred_check_branch
      %42 = sbr.rel (0) target = $region33
    $region32: #{tpu_custom_call.1} parent=1 // pred_region
      _
    $region33: #{tpu_custom_call.1} parent=1 // pred_fallthru
      _
    // Predicated region
    $region34: #{tpu_custom_call.1} parent=1 // pred_check
      _
    $region35: #{tpu_custom_call.1} parent=1 // pred_check_branch
      %44 = sbr.rel (0) target = $region37
    $region36: #{tpu_custom_call.1} parent=1 // pred_region
      _
    $region37: #{tpu_custom_call.1} parent=1 // pred_fallthru
      _
    // Predicated region
    $region38: #{tpu_custom_call.1} parent=1 // pred_check
      _
    $region39: #{tpu_custom_call.1} parent=1 // pred_check_branch
      %46 = sbr.rel (0) target = $region41
    $region40: #{tpu_custom_call.1} parent=1 // pred_region
      %47 = dma.done [#allocation4], 256
    $region41: #{tpu_custom_call.1} parent=1 // pred_fallthru
      _
    %v49 = vld [vmem:[%s0] sm:$0xff]
    %v50 = vld [vmem:[%s0 + $0x8] sm:$0xff]
    %v51 = vpack.c.bf16 %v50, %v49
    %s52 = sld [smem:[#allocation2]]
    %v53 = vld [vmem:[%s3] sm:$0x1]
    %v54 = vstv %s52
    %v55 = vmul.f32 %v54, %v53
    %v56 = vld [vmem:[#allocation3] sm:$0xf]
    %v57 = vld [vmem:[#allocation3 + $0x4] sm:$0xf]
    %v58 = vld [vmem:[#allocation3 + $0x8] sm:$0xf]
    %v59 = vld [vmem:[#allocation3 + $0xc] sm:$0xf]
    %v61 = vlaneseq
    %v62 = vshrl.u32 %v61, 7
    %v63 = vsub.s32 0, %v62
    %v64 = vrot.slane %v55, %v63
    %v70 = vunpack.c.l.b16 %v56
    %v71 = vunpack.c.l.b16 %v57
    %v72 = vunpack.c.l.b16 %v58
    %v73 = vunpack.c.l.b16 %v59
    %v74 = vpack.c.b16 %v71, %v70
    %v75 = vpack.c.b16 %v73, %v72
    %vm78 = vcmask 261120
    %v80 = vsel %vm78, %v51, 0
    %82 = vmatprep.subr.bf16.mxu0 0
    %83 = vmatpush1.bf16.msra.mxu0 %v74
    %84 = vmatprep.subr.bf16.mxu0 0
    %85 = vmatpush1.bf16.msra.mxu0 %v75
    %86 = vmatprep.subr.bf16.mxu0 0
    %87 = vmatpush1.bf16.msra.mxu0 0
    %88 = vmatprep.subr.bf16.mxu0 0
    %89 = vmatpush1.bf16.msra.mxu0 0
    %90 = vmatprep.subr.bf16.mxu0 0
    %91 = vmatpush1.bf16.msra.mxu0 0
    %92 = vmatprep.subr.bf16.mxu0 0
    %93 = vmatpush1.bf16.msra.mxu0 0
    %94 = vmatprep.subr.bf16.mxu0 0
    %95 = vmatpush1.bf16.msra.mxu0 0
    %96 = vmatprep.subr.bf16.mxu0 0
    %97 = vmatpush1.bf16.msra.mxu0 0
    %98 = vmatprep.subr.bf16.mxu0 0
    %99 = vmatpush1.bf16.msra.mxu0 0
    %100 = vmatprep.subr.bf16.mxu0 0
    %101 = vmatpush1.bf16.msra.mxu0 0
    %102 = vmatprep.subr.bf16.mxu0 0
    %103 = vmatpush1.bf16.msra.mxu0 0
    %104 = vmatprep.subr.bf16.mxu0 0
    %105 = vmatpush1.bf16.msra.mxu0 0
    %106 = vmatprep.subr.bf16.mxu0 0
    %107 = vmatpush1.bf16.msra.mxu0 0
    %108 = vmatprep.subr.bf16.mxu0 0
    %109 = vmatpush1.bf16.msra.mxu0 0
    %110 = vmatprep.subr.bf16.mxu0 0
    %111 = vmatpush1.bf16.msra.mxu0 0
    %112 = vmatprep.subr.bf16.mxu0 0
    %113 = vmatpush1.bf16.msra.mxu0 0
    %114 = vmatprep.mubr.bf16.mxu0 0
    %115 = vmatmul.mubr.bf16.gmra.mrb[0].mxu0 %v80
    %v116 = vpop.f32.mrb[0].mxu0
    %v117 = vadd.f32 %v64, %v116
    %v118 = vpop.f32.mrb[0].mxu0
    %v119 = vpop.f32.mrb[0].mxu0
    %v120 = vadd.f32 %v64, %v119
    %v121 = vpop.f32.mrb[0].mxu0
    %122 = vdwg.mxu0
    %v123 = vld [vmem:[%s4] sm:$0x1]
    %v125 = vlaneseq
    %v126 = vshrl.u32 %v125, 7
    %v127 = vsub.s32 0, %v126
    %v128 = vrot.slane %v123, %v127
    %v130 = vadd.f32 %v117, %v128
    %v131 = vadd.f32 %v120, %v128
    %vm132 = vcmp.gt.f32.partialorder %v130, 0.0
    %vm133 = vcmp.gt.f32.partialorder %v131, 0.0
    %v134 = vmin.f32 %v130, 0.0
    %v135 = vmin.f32 %v131, 0.0
    %v136 = vmul.f32 %v134, 1.442695
    %v137 = vpow.pop %v136
    %v138 = vmul.f32 %v135, 1.442695
    %v139 = vpow.pop %v138
    %v140 = vsub.f32 %v137, 1.0
    %v141 = vsub.f32 %v139, 1.0
    %v142 = vmul.f32 %v140, 1.6732632
    %v143 = vmul.f32 %v141, 1.6732632
    %v144 = vsel %vm132, %v130, %v142
    %v145 = vsel %vm133, %v131, %v143
    %v146 = vmul.f32 %v144, 1.050701
    %v147 = vmul.f32 %v145, 1.050701
    %v148 = vpack.c.bf16 %v147, %v146
    %v149 = vld [vmem:[%s5] sm:$0xf]
    %v150 = vld [vmem:[%s5 + $0x4] sm:$0xf]
    %v151 = vld [vmem:[%s5 + $0x8] sm:$0xf]
    %v152 = vld [vmem:[%s5 + $0xc] sm:$0xf]
    %v153 = vld [vmem:[%s5 + $0x10] sm:$0xf]
    %v154 = vld [vmem:[%s5 + $0x14] sm:$0xf]
    %v155 = vld [vmem:[%s5 + $0x18] sm:$0xf]
    %v156 = vld [vmem:[%s5 + $0x1c] sm:$0xf]
    %v157 = vld [vmem:[%s6] sm:$0x1]
    %v159 = vlaneseq
    %v160 = vshrl.u32 %v159, 7
    %v161 = vsub.s32 0, %v160
    %v162 = vrot.slane %v157, %v161
    %v172 = vunpack.c.l.b16 %v149
    %v173 = vunpack.c.l.b16 %v150
    %v174 = vunpack.c.l.b16 %v151
    %v175 = vunpack.c.l.b16 %v152
    %v176 = vunpack.c.l.b16 %v153
    %v177 = vunpack.c.l.b16 %v154
    %v178 = vunpack.c.l.b16 %v155
    %v179 = vunpack.c.l.b16 %v156
    %v180 = vpack.c.b16 %v173, %v172
    %v181 = vpack.c.b16 %v175, %v174
    %v182 = vpack.c.b16 %v177, %v176
    %v183 = vpack.c.b16 %v179, %v178
    %vm188 = vcmask 523264
    %v190 = vsel %vm188, %v148, 0
    %192 = vmatprep.subr.bf16.mxu0 0
    %193 = vmatpush1.bf16.msra.mxu0 %v180
    %194 = vmatprep.subr.bf16.mxu0 0
    %195 = vmatpush1.bf16.msra.mxu0 %v181
    %196 = vmatprep.subr.bf16.mxu0 0
    %197 = vmatpush1.bf16.msra.mxu0 %v182
    %198 = vmatprep.subr.bf16.mxu0 0
    %199 = vmatpush1.bf16.msra.mxu0 %v183
    %200 = vmatprep.subr.bf16.mxu0 0
    %201 = vmatpush1.bf16.msra.mxu0 0
    %202 = vmatprep.subr.bf16.mxu0 0
    %203 = vmatpush1.bf16.msra.mxu0 0
    %204 = vmatprep.subr.bf16.mxu0 0
    %205 = vmatpush1.bf16.msra.mxu0 0
    %206 = vmatprep.subr.bf16.mxu0 0
    %207 = vmatpush1.bf16.msra.mxu0 0
    %208 = vmatprep.subr.bf16.mxu0 0
    %209 = vmatpush1.bf16.msra.mxu0 0
    %210 = vmatprep.subr.bf16.mxu0 0
    %211 = vmatpush1.bf16.msra.mxu0 0
    %212 = vmatprep.subr.bf16.mxu0 0
    %213 = vmatpush1.bf16.msra.mxu0 0
    %214 = vmatprep.subr.bf16.mxu0 0
    %215 = vmatpush1.bf16.msra.mxu0 0
    %216 = vmatprep.subr.bf16.mxu0 0
    %217 = vmatpush1.bf16.msra.mxu0 0
    %218 = vmatprep.subr.bf16.mxu0 0
    %219 = vmatpush1.bf16.msra.mxu0 0
    %220 = vmatprep.subr.bf16.mxu0 0
    %221 = vmatpush1.bf16.msra.mxu0 0
    %222 = vmatprep.subr.bf16.mxu0 0
    %223 = vmatpush1.bf16.msra.mxu0 0
    %224 = vmatprep.mubr.bf16.mxu0 0
    %225 = vmatmul.mubr.bf16.gmra.mrb[0].mxu0 %v190
    %v226 = vpop.f32.mrb[0].mxu0
    %v227 = vadd.f32 %v162, %v226
    %v228 = vpop.f32.mrb[0].mxu0
    %v229 = vpop.f32.mrb[0].mxu0
    %v230 = vadd.f32 %v162, %v229
    %v231 = vpop.f32.mrb[0].mxu0
    %232 = vdwg.mxu0
    %vm233 = vcmp.gt.f32.partialorder %v227, 0.0
    %vm234 = vcmp.gt.f32.partialorder %v230, 0.0
    %v235 = vmin.f32 %v227, 0.0
    %v236 = vmin.f32 %v230, 0.0
    %v237 = vmul.f32 %v235, 1.442695
    %v238 = vpow.pop %v237
    %v239 = vmul.f32 %v236, 1.442695
    %v240 = vpow.pop %v239
    %v241 = vsub.f32 %v238, 1.0
    %v242 = vsub.f32 %v240, 1.0
    %v243 = vmul.f32 %v241, 1.6732632
    %v244 = vmul.f32 %v242, 1.6732632
    %v245 = vsel %vm233, %v227, %v243
    %v246 = vsel %vm234, %v230, %v244
    %v247 = vmul.f32 %v245, 1.050701
    %v248 = vmul.f32 %v246, 1.050701
    %v249 = vpack.c.bf16 %v248, %v247
    %v250 = vld [vmem:[%s7] sm:$0xf]
    %v251 = vld [vmem:[%s7 + $0x4] sm:$0xf]
    %v252 = vld [vmem:[%s7 + $0x8] sm:$0xf]
    %v253 = vld [vmem:[%s7 + $0xc] sm:$0xf]
    %v254 = vld [vmem:[%s7 + $0x10] sm:$0xf]
    %v255 = vld [vmem:[%s7 + $0x14] sm:$0xf]
    %v256 = vld [vmem:[%s7 + $0x18] sm:$0xf]
    %v257 = vld [vmem:[%s7 + $0x1c] sm:$0xf]
    %v258 = vld [vmem:[%s8] sm:$0x1]
    %v260 = vlaneseq
    %v261 = vshrl.u32 %v260, 7
    %v262 = vsub.s32 0, %v261
    %v263 = vrot.slane %v258, %v262
    %v273 = vunpack.c.l.b16 %v250
    %v274 = vunpack.c.l.b16 %v251
    %v275 = vunpack.c.l.b16 %v252
    %v276 = vunpack.c.l.b16 %v253
    %v277 = vunpack.c.l.b16 %v254
    %v278 = vunpack.c.l.b16 %v255
    %v279 = vunpack.c.l.b16 %v256
    %v280 = vunpack.c.l.b16 %v257
    %v281 = vpack.c.b16 %v274, %v273
    %v282 = vpack.c.b16 %v276, %v275
    %v283 = vpack.c.b16 %v278, %v277
    %v284 = vpack.c.b16 %v280, %v279
    %v290 = vsel %vm188, %v249, 0
    %292 = vmatprep.subr.bf16.mxu0 0
    %293 = vmatpush1.bf16.msra.mxu0 %v281
    %294 = vmatprep.subr.bf16.mxu0 0
    %295 = vmatpush1.bf16.msra.mxu0 %v282
    %296 = vmatprep.subr.bf16.mxu0 0
    %297 = vmatpush1.bf16.msra.mxu0 %v283
    %298 = vmatprep.subr.bf16.mxu0 0
    %299 = vmatpush1.bf16.msra.mxu0 %v284
    %300 = vmatprep.subr.bf16.mxu0 0
    %301 = vmatpush1.bf16.msra.mxu0 0
    %302 = vmatprep.subr.bf16.mxu0 0
    %303 = vmatpush1.bf16.msra.mxu0 0
    %304 = vmatprep.subr.bf16.mxu0 0
    %305 = vmatpush1.bf16.msra.mxu0 0
    %306 = vmatprep.subr.bf16.mxu0 0
    %307 = vmatpush1.bf16.msra.mxu0 0
    %308 = vmatprep.subr.bf16.mxu0 0
    %309 = vmatpush1.bf16.msra.mxu0 0
    %310 = vmatprep.subr.bf16.mxu0 0
    %311 = vmatpush1.bf16.msra.mxu0 0
    %312 = vmatprep.subr.bf16.mxu0 0
    %313 = vmatpush1.bf16.msra.mxu0 0
    %314 = vmatprep.subr.bf16.mxu0 0
    %315 = vmatpush1.bf16.msra.mxu0 0
    %316 = vmatprep.subr.bf16.mxu0 0
    %317 = vmatpush1.bf16.msra.mxu0 0
    %318 = vmatprep.subr.bf16.mxu0 0
    %319 = vmatpush1.bf16.msra.mxu0 0
    %320 = vmatprep.subr.bf16.mxu0 0
    %321 = vmatpush1.bf16.msra.mxu0 0
    %322 = vmatprep.subr.bf16.mxu0 0
    %323 = vmatpush1.bf16.msra.mxu0 0
    %324 = vmatprep.mubr.bf16.mxu0 0
    %325 = vmatmul.mubr.bf16.gmra.mrb[0].mxu0 %v290
    %v326 = vpop.f32.mrb[0].mxu0
    %v327 = vadd.f32 %v263, %v326
    %v328 = vpop.f32.mrb[0].mxu0
    %v329 = vpop.f32.mrb[0].mxu0
    %v330 = vadd.f32 %v263, %v329
    %v331 = vpop.f32.mrb[0].mxu0
    %332 = vdwg.mxu0
    %333 = vst.msk [vmem:[#allocation6] sm:$0xff] %vm78, %v327
    %334 = vst.msk [vmem:[#allocation6 + $0x8] sm:$0xff] %vm78, %v330
    // Predicated region
    $region42: #{tpu_custom_call.1} parent=1 // pred_check
      _
    $region43: #{tpu_custom_call.1} parent=1 // pred_check_branch
      %336 = sbr.rel (0) target = $region45
    $region44: #{tpu_custom_call.1} parent=1 // pred_region
      %s338 = ssub.s32 256, 256
      %339 = vsyncadd [#allocation5], %s338
      %s340 = sshll.u32 [#allocation6], 4
      %s341 = int_to_ptr.vmem [resolvable:$true] %s340
      %346 = dma.vmem_to_hbm [thread:$0]  %s341, 256, %s9, [#allocation5], 128, 128, 8
    $region45: #{tpu_custom_call.1} parent=1 // pred_fallthru
      _
    // Predicated region
    $region46: #{tpu_custom_call.1} parent=1 // pred_check
      _
    $region47: #{tpu_custom_call.1} parent=1 // pred_check_branch
      %348 = sbr.rel (0) target = $region49
    $region48: #{tpu_custom_call.1} parent=1 // pred_region
      %349 = dma.done [#allocation5], 256
    $region49: #{tpu_custom_call.1} parent=1 // pred_fallthru
      _
    %350 = vsyncpa [#allocation4], 1
    %351 = vsyncpa [#allocation5], 1

</llo_original>
